<compile_context>
chip_gen: v7x
topology: tpu7x:2x2x1
jax: 0.10.0
libtpu: 0.0.40
codegen_flags: <defaults>
</compile_context>

<pallas_src>
import jax
import jax.numpy as jnp
from jax.experimental import pallas as pl
from jax.experimental.pallas import tpu as pltpu

MAX_NUM_CATEGORY = 5
MIN_NUM_CATEGORY = 2


def _pi_k_kernel(lamb_ref, pis_ref, nks_ref, out_ref):
    # lamb_ref: SMEM (1,) scalar-prefetch; pis_ref: (TB, c2); nks_ref: (1, c2).
    lamb = lamb_ref[0]
    # Fold lamb into nks (exact for lamb != 0; numerator and denominator both
    # carry the 1/lamb factor, which cancels).
    scaled_nks = nks_ref[...] * lamb                 # (1, c2): tiny, once per step
    alpha_prime = pis_ref[...] + scaled_nks          # single VPU add over the tile
    c2 = alpha_prime.shape[1]
    # Unrolled row sum over the small static channel axis (c2 <= 5 real lanes)
    # instead of a full padded-128-lane reduce.
    row_sum = alpha_prime[:, 0:1]
    for i in range(1, c2):
        row_sum = row_sum + alpha_prime[:, i:i + 1]
    inv = pl.reciprocal(row_sum, approx=False)       # exact 1/x on the (TB, 1) column
    out_ref[...] = alpha_prime * inv                 # cheap broadcast multiply


def pi_k_forward(pis, lamb, nks, *, block_rows=None):
    """pis: (b, c2) f32; lamb: (1,) f32; nks: (max_num_category,) f32."""
    b, c2 = pis.shape
    sliced_nks = nks[:c2].reshape(1, c2)             # glue: slice + reshape in JAX

    if block_rows is None:
        block_rows = min(b, 1024)                    # keeps per-step VMEM small (fits v7x 64 MiB)
    tb = min(block_rows, b)
    if tb != b and tb % 8 != 0:
        tb = max(8, (tb // 8) * 8)                   # satisfy the (8, 128) sublane rule
    grid = (pl.cdiv(b, tb),)

    return pl.pallas_call(
        _pi_k_kernel,
        out_shape=jax.ShapeDtypeStruct((b, c2), pis.dtype),
        grid_spec=pltpu.PrefetchScalarGridSpec(
            num_scalar_prefetch=1,                                        # lamb -> SMEM
            grid=grid,
            in_specs=[
                pl.BlockSpec((tb, c2), lambda i, lamb_ref: (i, 0)),       # pis batch tile
                pl.BlockSpec((1, c2), lambda i, lamb_ref: (0, 0)),        # nks (resident)
            ],
            out_specs=pl.BlockSpec((tb, c2), lambda i, lamb_ref: (i, 0)),
        ),
        compiler_params=pltpu.CompilerParams(
            dimension_semantics=("parallel",),       # rows are independent -> megacore-shardable
        ),
    )(lamb, pis, sliced_nks)


def pi_k_reference(pis, lamb, nks):
    b, c2 = pis.shape
    alpha_k = pis / lamb[0]
    alpha_k_prime = nks[:c2][None, :] + alpha_k
    return alpha_k_prime / jnp.sum(alpha_k_prime, axis=1, keepdims=True)


if __name__ == "__main__":
    key = jax.random.PRNGKey(0)
    k1, k2 = jax.random.split(key)

    init_lamb = 0.5
    lamb = jnp.ones((1,), dtype=jnp.float32) * init_lamb   # matches module __init__

    # --- Case 1: module-default init (nks == zeros), tiny batch -------------
    b, c2 = 2, 4
    nks = jnp.zeros((MAX_NUM_CATEGORY,), dtype=jnp.float32)
    pis = jax.nn.softmax(jax.random.normal(k1, (b, c2), dtype=jnp.float32), axis=-1)

    out = jax.block_until_ready(pi_k_forward(pis, lamb, nks))
    ref = pi_k_reference(pis, lamb, nks)
    assert out.shape == (b, c2)
    assert jnp.allclose(out, ref, atol=1e-6, rtol=1e-6), (out, ref)

    # --- Case 2: nonzero nks + multi-block batch grid (exercises tiling) ----
    b2, c22 = 16, 3
    nks2 = jnp.arange(1, MAX_NUM_CATEGORY + 1, dtype=jnp.float32) * 0.1
    pis2 = jax.nn.softmax(jax.random.normal(k2, (b2, c22), dtype=jnp.float32), axis=-1)

    out2 = jax.block_until_ready(pi_k_forward(pis2, lamb, nks2, block_rows=8))
    ref2 = pi_k_reference(pis2, lamb, nks2)
    assert out2.shape == (b2, c22)
    assert jnp.allclose(out2, ref2, atol=1e-6, rtol=1e-6), (out2, ref2)

    print("KERNEL_OK")
</pallas_src>

<mosaic_0001>
module attributes {stable_mosaic.version = 11 : i64} {
  func.func @_pi_k_kernel(%arg0: i32, %arg1: memref<1xf32, #tpu.memory_space<smem>>, %arg2: memref<2x4xf32, #tpu.memory_space<vmem>>, %arg3: memref<1x4xf32, #tpu.memory_space<vmem>>, %arg4: memref<2x4xf32, #tpu.memory_space<vmem>>) attributes {dimension_semantics = [#tpu.dimension_semantics<parallel>], iteration_bounds = array<i64: 1>, scalar_prefetch = 1 : i64, scratch_operands = 0 : i64, tpu.core_type = #tpu.core_type<tc>, window_params = [{transform_indices = @transform_0, window_bounds = array<i64: 2, 4>}, {pipeline_mode = #tpu.pipeline_mode<synchronous>, transform_indices = @transform_1, window_bounds = array<i64: 1, 4>}, {transform_indices = @transform_2, window_bounds = array<i64: 2, 4>}]} {
    %c0 = arith.constant 0 : index
    %0 = memref.load %arg1[%c0] : memref<1xf32, #tpu.memory_space<smem>>
    %c0_0 = arith.constant 0 : index
    %c0_1 = arith.constant 0 : index
    %1 = vector.load %arg3[%c0_0, %c0_1] : memref<1x4xf32, #tpu.memory_space<vmem>>, vector<1x4xf32>
    %2 = vector.broadcast %0 : f32 to vector<1x4xf32>
    %3 = arith.mulf %1, %2 : vector<1x4xf32>
    %c0_2 = arith.constant 0 : index
    %c0_3 = arith.constant 0 : index
    %4 = vector.load %arg2[%c0_2, %c0_3] : memref<2x4xf32, #tpu.memory_space<vmem>>, vector<2x4xf32>
    %5 = vector.broadcast %3 : vector<1x4xf32> to vector<2x4xf32>
    %6 = arith.addf %4, %5 : vector<2x4xf32>
    %7 = vector.extract_strided_slice %6 {offsets = [0, 0], sizes = [2, 1], strides = [1, 1]} : vector<2x4xf32> to vector<2x1xf32>
    %8 = vector.extract_strided_slice %6 {offsets = [0, 1], sizes = [2, 1], strides = [1, 1]} : vector<2x4xf32> to vector<2x1xf32>
    %9 = arith.addf %7, %8 : vector<2x1xf32>
    %10 = vector.extract_strided_slice %6 {offsets = [0, 2], sizes = [2, 1], strides = [1, 1]} : vector<2x4xf32> to vector<2x1xf32>
    %11 = arith.addf %9, %10 : vector<2x1xf32>
    %12 = vector.extract_strided_slice %6 {offsets = [0, 3], sizes = [2, 1], strides = [1, 1]} : vector<2x4xf32> to vector<2x1xf32>
    %13 = arith.addf %11, %12 : vector<2x1xf32>
    %14 = tpu.reciprocal %13 : vector<2x1xf32> -> vector<2x1xf32>
    %15 = vector.broadcast %14 : vector<2x1xf32> to vector<2x4xf32>
    %16 = arith.mulf %6, %15 : vector<2x4xf32>
    %c0_4 = arith.constant 0 : index
    %c0_5 = arith.constant 0 : index
    %17 = vector.load %arg4[%c0_4, %c0_5] : memref<2x4xf32, #tpu.memory_space<vmem>>, vector<2x4xf32>
    tpu.vector_store %arg4[%c0_4, %c0_5], %16 {strides = array<i32>} : memref<2x4xf32, #tpu.memory_space<vmem>>, vector<2x4xf32>,
    return
  }
  func.func @transform_0(%arg0: i32, %arg1: memref<1xf32, #tpu.memory_space<smem>>) -> (i32, i32) {
    %c0_i32 = arith.constant 0 : i32
    %c0_i32_0 = arith.constant 0 : i32
    return %arg0, %c0_i32 : i32, i32
  }
  func.func @transform_1(%arg0: i32, %arg1: memref<1xf32, #tpu.memory_space<smem>>) -> (i32, i32) {
    %c0_i32 = arith.constant 0 : i32
    %c0_i32_0 = arith.constant 0 : i32
    %c0_i32_1 = arith.constant 0 : i32
    return %c0_i32, %c0_i32_0 : i32, i32
  }
  func.func @transform_2(%arg0: i32, %arg1: memref<1xf32, #tpu.memory_space<smem>>) -> (i32, i32) {
    %c0_i32 = arith.constant 0 : i32
    %c0_i32_0 = arith.constant 0 : i32
    return %arg0, %c0_i32 : i32, i32
  }
}

</mosaic_0001>

<llo_original>
// kernel: tpu_custom_call.1
$region0: #{tpu_custom_call.1}
  #allocation0 [shape = 'u32[]', space=smem, size = 0x4, offset = 0x4, fixed_abs, tag = 'smem constant byte address 0x4 - core index']
  #allocation1 [shape = 'u32[144,128]{1,0:T(1,128)}', space=vmem, size = 0x12000, scoped, tag = 'internal scratch']
  #allocation2 [shape = 's32[1]{0}', space=sflag, size = 0x4, scoped, tag = 'scoped memory for tpu_custom_call.1']
  #allocation3 [shape = 'f32[1]{0:T(128)S(6)}', space=smem, size = 0x200, scoped, tag = 'prefetched SMEM operand 0']
  %s0 = inlined_call_operand.<no memory space> [shape: f32[1], index: 0, kind: input, shape index: {}]
  %s1 = inlined_call_operand.vmem [shape: f32[2,4], index: 1, kind: input, shape index: {}]
  %s2 = inlined_call_operand.vmem [shape: f32[1,4], index: 2, kind: input, shape index: {}]
  %s3 = inlined_call_operand.hbm [shape: f32[2,4], index: 3, kind: output, shape index: {}]
  %s4 = sld [smem:[#allocation0]]
  $region18: #{tpu_custom_call.1} parent=0
    _
  %s6 = ssub.s32 1, %s4
  %s7 = scalar_select 0, %s6, %s4
  %8 = sst [smem:[#allocation3]] %s0
  $region1: #{tpu_custom_call.1} parent=0
    #allocation4 [shape = 'u8[1024]{0}', space=vmem, size = 0x400, scoped, tag = 'output window, operand 0, single buffered']
    #allocation5 [shape = 's32[1]{0}', space=sflag, size = 0x4, scoped, tag = 'scoped memory for tpu_custom_call.1']
    %9 = vsyncpa [#allocation5], 0
    // Predicated region
    $region2: #{tpu_custom_call.1} parent=1 // pred_check
      _
    $region3: #{tpu_custom_call.1} parent=1 // pred_check_branch
      %11 = sbr.rel (0) target = $region5
    $region4: #{tpu_custom_call.1} parent=1 // pred_region
      _
    $region5: #{tpu_custom_call.1} parent=1 // pred_fallthru
      _
    // Predicated region
    $region6: #{tpu_custom_call.1} parent=1 // pred_check
      _
    $region7: #{tpu_custom_call.1} parent=1 // pred_check_branch
      %13 = sbr.rel (0) target = $region9
    $region8: #{tpu_custom_call.1} parent=1 // pred_region
      _
    $region9: #{tpu_custom_call.1} parent=1 // pred_fallthru
      _
    %s14 = sld [smem:[#allocation3]]
    %v15 = vld [vmem:[%s2] sm:$0x1]
    %v16 = vstv %s14
    %v17 = vmul.f32 %v15, %v16
    %v18 = vld [vmem:[%s1] sm:$0x3]
    %v20 = vlaneseq
    %v21 = vshrl.u32 %v20, 7
    %v22 = vsub.s32 0, %v21
    %v23 = vrot.slane %v17, %v22
    %v25 = vadd.f32 %v18, %v23
    %27 = vrot.lane.b32.xlu0 %v25, 127
    %v28 = vpop.permute.xlu0 %27
    %v30 = vadd.f32 %v25, %v28
    %31 = vrot.lane.b32.xlu0 %v25, 126
    %v32 = vpop.permute.xlu0 %31
    %v34 = vadd.f32 %v30, %v32
    %35 = vrot.lane.b32.xlu0 %v25, 125
    %v36 = vpop.permute.xlu0 %35
    %v38 = vadd.f32 %v34, %v36
    %v39 = vrcp.pop %v38
    %41 = vset.pattern.permute.xlu0 0
    %42 = vperm.xlu0 %41, %v39
    %v43 = vpop.permute.xlu0 %42
    %v45 = vmul.f32 %v25, %v43
    %vm46 = vcmask 25600
    %47 = vst.msk [vmem:[#allocation4] sm:$0x3] %vm46, %v45
    // Predicated region
    $region10: #{tpu_custom_call.1} parent=1 // pred_check
      _
    $region11: #{tpu_custom_call.1} parent=1 // pred_check_branch
      %49 = sbr.rel (0) target = $region13
    $region12: #{tpu_custom_call.1} parent=1 // pred_region
      %s51 = ssub.s32 32, 32
      %52 = vsyncadd [#allocation5], %s51
      %s54 = sshll.u32 [#allocation4], 4
      %s55 = int_to_ptr.vmem [resolvable:$true] %s54
      %57 = dma.vmem_to_hbm [thread:$0]  %s55, 32, %s3, [#allocation5]
    $region13: #{tpu_custom_call.1} parent=1 // pred_fallthru
      _
    // Predicated region
    $region14: #{tpu_custom_call.1} parent=1 // pred_check
      _
    $region15: #{tpu_custom_call.1} parent=1 // pred_check_branch
      %59 = sbr.rel (0) target = $region17
    $region16: #{tpu_custom_call.1} parent=1 // pred_region
      %60 = dma.done [#allocation5], 32
    $region17: #{tpu_custom_call.1} parent=1 // pred_fallthru
      _
    %61 = vsyncpa [#allocation5], 1

</llo_original>
